<compile_context>
chip_gen: v7x
topology: tpu7x:2x2x1
jax: 0.10.0
libtpu: 0.0.40
codegen_flags: <defaults>
</compile_context>

<pallas_src>
import functools

import jax
import jax.numpy as jnp
from jax.experimental import pallas as pl
from jax.experimental.pallas import tpu as pltpu


def _is_v7x():
    try:
        return "v7" in jax.devices()[0].device_kind.lower()
    except Exception:
        return False


def _choose_batch_tile(B, bytes_per_image, target_block_bytes, want_multi_step):
    """Largest divisor of B whose block fits the target; on v7x prefer an even,
    >=2 step count so both TensorCores get balanced work."""
    tb_max = max(1, min(B, target_block_bytes // max(bytes_per_image, 1)))
    divisors = [t for t in range(tb_max, 0, -1) if B % t == 0]
    if want_multi_step and B > 1:
        for t in divisors:                      # even number of steps (2-TC balance)
            if (B // t) % 2 == 0:
                return t
        for t in divisors:                      # at least 2 steps
            if B // t >= 2:
                return t
    return divisors[0]


def se_kernel(x_ref, w1t_ref, w2t_ref, o_ref, *, inv_hw):
    # x block: (TB, C, HW); w1t: (C, C_red); w2t: (C_red, C)
    # Global average pool over the spatial axis (whole HW lives in the block).
    pooled = jnp.sum(x_ref[...].astype(jnp.float32), axis=-1) * inv_hw   # (TB, C)
    # FC1 + ReLU: one batched matmul for the whole block.
    h = jnp.dot(pooled, w1t_ref[...], preferred_element_type=jnp.float32)
    h = jnp.maximum(h, 0.0)                                              # (TB, C_red)
    # FC2 + h_sigmoid = relu6(y + 3) / 6
    y = jnp.dot(h, w2t_ref[...], preferred_element_type=jnp.float32)     # (TB, C)
    y = jnp.clip(y + 3.0, 0.0, 6.0) * (1.0 / 6.0)
    # Channel-wise rescale. Re-read the block from VMEM (a second vld is nearly
    # free: 3 load slots/cycle) instead of keeping a multi-MiB value live across
    # the reduce and both matmuls, which invites spills at larger TB.
    o_ref[...] = (x_ref[...] * y[:, :, None]).astype(o_ref.dtype)


def se_module(x, w1, w2, *, target_block_bytes=8 * 1024 * 1024):
    """x: (B, C, H, W); w1: (C//r, C); w2: (C, C//r) (PyTorch Linear layout)."""
    B, C, H, W = x.shape
    HW = H * W
    itemsize = jnp.dtype(x.dtype).itemsize
    bytes_per_image = C * HW * itemsize
    is_v7x = _is_v7x()

    # Batch tile: divisor of B (no batch padding / output slicing), sized for a
    # few-MiB block per grid step. Megacore-aware step count only on v7x (2 TCs);
    # on v5e/v6e (1 TC) splitting the grid further is pure pipeline overhead.
    TB = _choose_batch_tile(B, bytes_per_image, target_block_bytes, want_multi_step=is_v7x)
    steps = B // TB

    x_flat = x.reshape(B, C, HW)                # free reshape, no HBM pass

    # PyTorch Linear stores (out_features, in_features); pre-transpose once so the
    # kernel runs plain (TB, C) @ (C, C_red) and (TB, C_red) @ (C_red, C) matmuls.
    w1t = jnp.asarray(w1).T                     # (C, C_red)
    w2t = jnp.asarray(w2).T                     # (C_red, C)
    C_red = w1t.shape[1]

    # VMEM budget: double-buffered input + output blocks, resident weights, headroom.
    block_bytes = TB * bytes_per_image
    weight_bytes = (w1t.size + w2t.size) * jnp.dtype(w1t.dtype).itemsize
    vmem_needed = 4 * block_bytes + weight_bytes + (2 << 20)
    vmem_cap = (40 << 20) if is_v7x else (96 << 20)   # v7x has only 64 MiB physical VMEM/TC
    vmem_limit = int(min(max(vmem_needed, 16 << 20), vmem_cap))
    # TODO(synk): for very large activations (C*HW*itemsize per image > ~8 MiB) switch
    # to a squeeze+FC pass plus a fully HW-tiled scale pass instead of whole-image blocks.

    # Advisory cost hint: this kernel is strictly HBM-bandwidth bound.
    cost = pl.CostEstimate(
        flops=4 * B * C * C_red + 2 * B * C * HW,
        transcendentals=0,
        bytes_accessed=2 * B * C * HW * itemsize + weight_bytes,
    )

    kernel = functools.partial(se_kernel, inv_hw=1.0 / float(HW))

    out_flat = pl.pallas_call(
        kernel,
        out_shape=jax.ShapeDtypeStruct((B, C, HW), x.dtype),
        grid_spec=pltpu.PrefetchScalarGridSpec(
            num_scalar_prefetch=0,
            grid=(steps,),
            in_specs=[
                # Last two block dims equal the full array dims, so non-(8,128)
                # multiples (e.g. HW=49) are legal; Mosaic masks edge stores.
                pl.BlockSpec((TB, C, HW), lambda b: (b, 0, 0)),    # x: TB images / step
                pl.BlockSpec((C, C_red), lambda b: (0, 0)),        # W1^T (resident)
                pl.BlockSpec((C_red, C), lambda b: (0, 0)),        # W2^T (resident)
            ],
            out_specs=pl.BlockSpec((TB, C, HW), lambda b: (b, 0, 0)),
        ),
        compiler_params=pltpu.CompilerParams(
            dimension_semantics=("parallel",),
            vmem_limit_bytes=vmem_limit,
        ),
        cost_estimate=cost,
    )(x_flat, w1t, w2t)

    # No padding was introduced, so this reshape is free metadata-only.
    return out_flat.reshape(B, C, H, W)


def se_module_ref(x, w1, w2):
    """Pure-JAX reference matching the PyTorch forward exactly."""
    y = jnp.mean(x, axis=(2, 3))                   # AdaptiveAvgPool2d(1) -> (B, C)
    y = jnp.maximum(y @ w1.T, 0.0)                 # Linear(C, C//r, bias=False) + ReLU
    y = y @ w2.T                                   # Linear(C//r, C, bias=False)
    y = jnp.clip(y + 3.0, 0.0, 6.0) / 6.0          # h_sigmoid
    return x * y[:, :, None, None]


if __name__ == "__main__":
    # Shapes consistent with SEModule(channel=16, reduction=4)
    B, C, H, W = 2, 16, 16, 16
    reduction = 4
    C_red = C // reduction

    key = jax.random.PRNGKey(0)
    kx, k1, k2, kx2, kx3 = jax.random.split(key, 5)
    x = jax.random.normal(kx, (B, C, H, W), dtype=jnp.float32)
    # PyTorch Linear stores (out_features, in_features)
    w1 = jax.random.normal(k1, (C_red, C), dtype=jnp.float32) * 0.1
    w2 = jax.random.normal(k2, (C, C_red), dtype=jnp.float32) * 0.1

    out = se_module(x, w1, w2)
    out = jax.block_until_ready(out)
    ref = se_module_ref(x, w1, w2)
    assert out.shape == (B, C, H, W)
    assert jnp.allclose(out, ref, atol=1e-5, rtol=1e-5), "mismatch vs reference (16x16)"

    # Non-lane-aligned spatial path (7x7 -> HW=49, no host padding, masked stores).
    x2 = jax.random.normal(kx2, (B, C, 7, 7), dtype=jnp.float32)
    out2 = jax.block_until_ready(se_module(x2, w1, w2))
    ref2 = se_module_ref(x2, w1, w2)
    assert out2.shape == (B, C, 7, 7)
    assert jnp.allclose(out2, ref2, atol=1e-5, rtol=1e-5), "mismatch vs reference (7x7)"

    # Odd batch (exercises divisor-based tile selection, no batch padding).
    x3 = jax.random.normal(kx3, (3, C, 16, 16), dtype=jnp.float32)
    out3 = jax.block_until_ready(se_module(x3, w1, w2))
    ref3 = se_module_ref(x3, w1, w2)
    assert out3.shape == (3, C, 16, 16)
    assert jnp.allclose(out3, ref3, atol=1e-5, rtol=1e-5), "mismatch vs reference (B=3)"

    print("KERNEL_OK")
</pallas_src>

<mosaic_0001>
module attributes {stable_mosaic.version = 11 : i64} {
  func.func @se_kernel(%arg0: i32, %arg1: memref<2x16x256xf32, #tpu.memory_space<vmem>>, %arg2: memref<16x4xf32, #tpu.memory_space<vmem>>, %arg3: memref<4x16xf32, #tpu.memory_space<vmem>>, %arg4: memref<2x16x256xf32, #tpu.memory_space<vmem>>) attributes {dimension_semantics = [#tpu.dimension_semantics<parallel>], iteration_bounds = array<i64: 1>, scalar_prefetch = 0 : i64, scratch_operands = 0 : i64, tpu.core_type = #tpu.core_type<tc>, window_params = [{transform_indices = @transform_0, window_bounds = array<i64: 2, 16, 256>}, {pipeline_mode = #tpu.pipeline_mode<synchronous>, transform_indices = @transform_1, window_bounds = array<i64: 16, 4>}, {pipeline_mode = #tpu.pipeline_mode<synchronous>, transform_indices = @transform_2, window_bounds = array<i64: 4, 16>}, {transform_indices = @transform_3, window_bounds = array<i64: 2, 16, 256>}]} {
    %c0 = arith.constant 0 : index
    %c0_0 = arith.constant 0 : index
    %c0_1 = arith.constant 0 : index
    %0 = vector.load %arg1[%c0, %c0_0, %c0_1] : memref<2x16x256xf32, #tpu.memory_space<vmem>>, vector<2x16x256xf32>
    %cst = arith.constant dense<0.000000e+00> : vector<2x16xf32>
    %1 = vector.multi_reduction <add>, %0, %cst [2] : vector<2x16x256xf32> to vector<2x16xf32>
    %cst_2 = arith.constant 3.906250e-03 : f32
    %2 = vector.broadcast %cst_2 : f32 to vector<2x16xf32>
    %3 = arith.mulf %1, %2 : vector<2x16xf32>
    %c0_3 = arith.constant 0 : index
    %c0_4 = arith.constant 0 : index
    %4 = vector.load %arg2[%c0_3, %c0_4] : memref<16x4xf32, #tpu.memory_space<vmem>>, vector<16x4xf32>
    %cst_5 = arith.constant dense<0.000000e+00> : vector<2x4xf32>
    %5 = tpu.matmul %3, %4, %cst_5 {dimension_numbers = #tpu.dot_dimension_numbers<[1], [0], [0], [1], [0, 0, 1, 1], [], []>} : vector<2x16xf32>, vector<16x4xf32>, vector<2x4xf32> -> vector<2x4xf32>
    %cst_6 = arith.constant 0.000000e+00 : f32
    %6 = vector.broadcast %cst_6 : f32 to vector<2x4xf32>
    %7 = arith.maximumf %5, %6 : vector<2x4xf32>
    %c0_7 = arith.constant 0 : index
    %c0_8 = arith.constant 0 : index
    %8 = vector.load %arg3[%c0_7, %c0_8] : memref<4x16xf32, #tpu.memory_space<vmem>>, vector<4x16xf32>
    %cst_9 = arith.constant dense<0.000000e+00> : vector<2x16xf32>
    %9 = tpu.matmul %7, %8, %cst_9 {dimension_numbers = #tpu.dot_dimension_numbers<[1], [0], [0], [1], [0, 0, 1, 1], [], []>} : vector<2x4xf32>, vector<4x16xf32>, vector<2x16xf32> -> vector<2x16xf32>
    %cst_10 = arith.constant 3.000000e+00 : f32
    %10 = vector.broadcast %cst_10 : f32 to vector<2x16xf32>
    %11 = arith.addf %9, %10 : vector<2x16xf32>
    %cst_11 = arith.constant 0.000000e+00 : f32
    %cst_12 = arith.constant 6.000000e+00 : f32
    %12 = vector.broadcast %cst_11 : f32 to vector<2x16xf32>
    %13 = arith.maximumf %12, %11 : vector<2x16xf32>
    %14 = vector.broadcast %cst_12 : f32 to vector<2x16xf32>
    %15 = arith.minimumf %14, %13 : vector<2x16xf32>
    %cst_13 = arith.constant 0.166666672 : f32
    %16 = vector.broadcast %cst_13 : f32 to vector<2x16xf32>
    %17 = arith.mulf %15, %16 : vector<2x16xf32>
    %c0_14 = arith.constant 0 : index
    %c0_15 = arith.constant 0 : index
    %c0_16 = arith.constant 0 : index
    %18 = vector.load %arg1[%c0_14, %c0_15, %c0_16] : memref<2x16x256xf32, #tpu.memory_space<vmem>>, vector<2x16x256xf32>
    %19 = vector.shape_cast %17 : vector<2x16xf32> to vector<2x16x1xf32>
    %20 = vector.broadcast %19 : vector<2x16x1xf32> to vector<2x16x256xf32>
    %21 = arith.mulf %18, %20 : vector<2x16x256xf32>
    %c0_17 = arith.constant 0 : index
    %c0_18 = arith.constant 0 : index
    %c0_19 = arith.constant 0 : index
    %22 = vector.load %arg4[%c0_17, %c0_18, %c0_19] : memref<2x16x256xf32, #tpu.memory_space<vmem>>, vector<2x16x256xf32>
    tpu.vector_store %arg4[%c0_17, %c0_18, %c0_19], %21 {strides = array<i32>} : memref<2x16x256xf32, #tpu.memory_space<vmem>>, vector<2x16x256xf32>,
    return
  }
  func.func @transform_0(%arg0: i32) -> (i32, i32, i32) {
    %c0_i32 = arith.constant 0 : i32
    %c0_i32_0 = arith.constant 0 : i32
    %c0_i32_1 = arith.constant 0 : i32
    return %arg0, %c0_i32, %c0_i32_0 : i32, i32, i32
  }
  func.func @transform_1(%arg0: i32) -> (i32, i32) {
    %c0_i32 = arith.constant 0 : i32
    %c0_i32_0 = arith.constant 0 : i32
    %c0_i32_1 = arith.constant 0 : i32
    return %c0_i32, %c0_i32_0 : i32, i32
  }
  func.func @transform_2(%arg0: i32) -> (i32, i32) {
    %c0_i32 = arith.constant 0 : i32
    %c0_i32_0 = arith.constant 0 : i32
    %c0_i32_1 = arith.constant 0 : i32
    return %c0_i32, %c0_i32_0 : i32, i32
  }
  func.func @transform_3(%arg0: i32) -> (i32, i32, i32) {
    %c0_i32 = arith.constant 0 : i32
    %c0_i32_0 = arith.constant 0 : i32
    %c0_i32_1 = arith.constant 0 : i32
    return %arg0, %c0_i32, %c0_i32_0 : i32, i32, i32
  }
}

</mosaic_0001>

<llo_original>
// kernel: tpu_custom_call.1
$region0: #{tpu_custom_call.1}
  #allocation0 [shape = 'u32[]', space=smem, size = 0x4, offset = 0x4, fixed_abs, tag = 'smem constant byte address 0x4 - core index']
  #allocation1 [shape = 'u32[144,128]{1,0:T(1,128)}', space=vmem, size = 0x12000, scoped, tag = 'internal scratch']
  %s0 = inlined_call_operand.hbm [shape: f32[2,16,256], index: 0, kind: input, shape index: {}]
  %s1 = inlined_call_operand.vmem [shape: f32[16,4], index: 1, kind: input, shape index: {}]
  %s2 = inlined_call_operand.vmem [shape: f32[4,16], index: 2, kind: input, shape index: {}]
  %s3 = inlined_call_operand.hbm [shape: f32[2,16,256], index: 3, kind: output, shape index: {}]
  %s4 = sld [smem:[#allocation0]]
  $region26: #{tpu_custom_call.1} parent=0
    _
  %s6 = ssub.s32 1, %s4
  %s7 = scalar_select 0, %s6, %s4
  $region1: #{tpu_custom_call.1} parent=0
    #allocation2 [shape = 'u8[32768]{0}', space=vmem, size = 0x8000, scoped, tag = 'input window, operand 0, single buffered']
    #allocation3 [shape = 's32[1]{0}', space=sflag, size = 0x4, scoped, tag = 'scoped memory for tpu_custom_call.1']
    #allocation4 [shape = 's32[1]{0}', space=sflag, size = 0x4, scoped, tag = 'scoped memory for tpu_custom_call.1']
    #allocation5 [shape = 'u8[32768]{0}', space=vmem, size = 0x8000, scoped, tag = 'output window, operand 0, single buffered']
    %8 = vsyncpa [#allocation3], 0
    %9 = vsyncpa [#allocation4], 0
    // Predicated region
    $region2: #{tpu_custom_call.1} parent=1 // pred_check
      _
    $region3: #{tpu_custom_call.1} parent=1 // pred_check_branch
      %11 = sbr.rel (0) target = $region5
    $region4: #{tpu_custom_call.1} parent=1 // pred_region
      %s13 = ssub.s32 1024, 1024
      %14 = vsyncadd [#allocation3], %s13
      %s15 = sshll.u32 [#allocation2], 4
      %s16 = int_to_ptr.vmem [resolvable:$true] %s15
      %21 = dma.hbm_to_vmem [thread:$0]  %s0, 1024, %s16, [#allocation3], 256, 256, 16
    $region5: #{tpu_custom_call.1} parent=1 // pred_fallthru
      _
    // Predicated region
    $region6: #{tpu_custom_call.1} parent=1 // pred_check
      _
    $region7: #{tpu_custom_call.1} parent=1 // pred_check_branch
      %23 = sbr.rel (0) target = $region9
    $region8: #{tpu_custom_call.1} parent=1 // pred_region
      _
    $region9: #{tpu_custom_call.1} parent=1 // pred_fallthru
      _
    // Predicated region
    $region10: #{tpu_custom_call.1} parent=1 // pred_check
      _
    $region11: #{tpu_custom_call.1} parent=1 // pred_check_branch
      %25 = sbr.rel (0) target = $region13
    $region12: #{tpu_custom_call.1} parent=1 // pred_region
      _
    $region13: #{tpu_custom_call.1} parent=1 // pred_fallthru
      _
    // Predicated region
    $region14: #{tpu_custom_call.1} parent=1 // pred_check
      _
    $region15: #{tpu_custom_call.1} parent=1 // pred_check_branch
      %27 = sbr.rel (0) target = $region17
    $region16: #{tpu_custom_call.1} parent=1 // pred_region
      %28 = dma.done [#allocation3], 1024
    $region17: #{tpu_custom_call.1} parent=1 // pred_fallthru
      _
    %v29 = vld [vmem:[#allocation2] sm:$0xff]
    %v30 = vld [vmem:[#allocation2 + $0x8] sm:$0xff]
    %v31 = vld [vmem:[#allocation2 + $0x10] sm:$0xff]
    %v32 = vld [vmem:[#allocation2 + $0x18] sm:$0xff]
    %v33 = vld [vmem:[#allocation2 + $0x20] sm:$0xff]
    %v34 = vld [vmem:[#allocation2 + $0x28] sm:$0xff]
    %v35 = vld [vmem:[#allocation2 + $0x30] sm:$0xff]
    %v36 = vld [vmem:[#allocation2 + $0x38] sm:$0xff]
    %v37 = vadd.f32 %v29, %v30
    %38 = vadd.xlane.f32.xlu0 %v37
    %v39 = vpop.xlane.xlu0 %38
    %v40 = vadd.f32 %v31, %v32
    %41 = vadd.xlane.f32.xlu0 %v40
    %v42 = vpop.xlane.xlu0 %41
    %v43 = vadd.f32 %v33, %v34
    %44 = vadd.xlane.f32.xlu0 %v43
    %v45 = vpop.xlane.xlu0 %44
    %v46 = vadd.f32 %v35, %v36
    %47 = vadd.xlane.f32.xlu0 %v46
    %v48 = vpop.xlane.xlu0 %47
    %v49 = vmul.f32 %v39, 0.00390625
    %v50 = vmul.f32 %v42, 0.00390625
    %v51 = vmul.f32 %v45, 0.00390625
    %v52 = vmul.f32 %v48, 0.00390625
    %v53 = vld [vmem:[%s1] sm:$0xff]
    %v54 = vld [vmem:[%s1 + $0x8] sm:$0xff]
    %v59 = vlaneseq
    %v60 = vand.u32 %v59, 127
    %v61 = vlaneseq
    %v62 = vshrl.u32 %v61, 7
    %v63 = vsub.s32 %v60, %v62
    %v64 = vrot.slane %v49, %v63
    %v65 = vadd.s32 %v60, 4294967288
    %v66 = vlaneseq
    %v67 = vshrl.u32 %v66, 7
    %v68 = vsub.s32 %v65, %v67
    %v69 = vrot.slane %v50, %v68
    %vm70 = vcmask 130112
    %v71 = vsel %vm70, %v69, %v64
    %v72 = vlaneseq
    %v73 = vshrl.u32 %v72, 7
    %v74 = vsub.s32 %v60, %v73
    %v75 = vrot.slane %v51, %v74
    %v76 = vlaneseq
    %v77 = vshrl.u32 %v76, 7
    %v78 = vsub.s32 %v65, %v77
    %v79 = vrot.slane %v52, %v78
    %v80 = vsel %vm70, %v79, %v75
    %vm81 = vcmask 1041409
    %v82 = vsel %vm81, %v80, %v71
    %vm83 = vcmask 130048
    %v84 = vsel %vm83, %v82, 0
    %86 = vmatprep.subr.mxu0 0.0
    %87 = vmatpush1.msra.mxu0 %v53
    %88 = vmatprep.subr.mxu0 0.0
    %89 = vmatpush1.msra.mxu0 %v54
    %90 = vmatprep.subr.mxu0 0.0
    %91 = vmatpush1.msra.mxu0 0.0
    %92 = vmatprep.subr.mxu0 0.0
    %93 = vmatpush1.msra.mxu0 0.0
    %94 = vmatprep.subr.mxu0 0.0
    %95 = vmatpush1.msra.mxu0 0.0
    %96 = vmatprep.subr.mxu0 0.0
    %97 = vmatpush1.msra.mxu0 0.0
    %98 = vmatprep.subr.mxu0 0.0
    %99 = vmatpush1.msra.mxu0 0.0
    %100 = vmatprep.subr.mxu0 0.0
    %101 = vmatpush1.msra.mxu0 0.0
    %102 = vmatprep.subr.mxu0 0.0
    %103 = vmatpush1.msra.mxu0 0.0
    %104 = vmatprep.subr.mxu0 0.0
    %105 = vmatpush1.msra.mxu0 0.0
    %106 = vmatprep.subr.mxu0 0.0
    %107 = vmatpush1.msra.mxu0 0.0
    %108 = vmatprep.subr.mxu0 0.0
    %109 = vmatpush1.msra.mxu0 0.0
    %110 = vmatprep.subr.mxu0 0.0
    %111 = vmatpush1.msra.mxu0 0.0
    %112 = vmatprep.subr.mxu0 0.0
    %113 = vmatpush1.msra.mxu0 0.0
    %114 = vmatprep.subr.mxu0 0.0
    %115 = vmatpush1.msra.mxu0 0.0
    %116 = vmatprep.subr.mxu0 0.0
    %117 = vmatpush1.msra.mxu0 0.0
    %118 = vmatprep.subr.mxu0 0.0
    %119 = vmatpush1.msra.mxu0 0.0
    %120 = vmatprep.subr.mxu0 0.0
    %121 = vmatpush1.msra.mxu0 0.0
    %122 = vmatprep.subr.mxu0 0.0
    %123 = vmatpush1.msra.mxu0 0.0
    %124 = vmatprep.subr.mxu0 0.0
    %125 = vmatpush1.msra.mxu0 0.0
    %126 = vmatprep.subr.mxu0 0.0
    %127 = vmatpush1.msra.mxu0 0.0
    %128 = vmatprep.subr.mxu0 0.0
    %129 = vmatpush1.msra.mxu0 0.0
    %130 = vmatprep.subr.mxu0 0.0
    %131 = vmatpush1.msra.mxu0 0.0
    %132 = vmatprep.subr.mxu0 0.0
    %133 = vmatpush1.msra.mxu0 0.0
    %134 = vmatprep.subr.mxu0 0.0
    %135 = vmatpush1.msra.mxu0 0.0
    %136 = vmatprep.subr.mxu0 0.0
    %137 = vmatpush1.msra.mxu0 0.0
    %138 = vmatprep.subr.mxu0 0.0
    %139 = vmatpush1.msra.mxu0 0.0
    %140 = vmatprep.subr.mxu0 0.0
    %141 = vmatpush1.msra.mxu0 0.0
    %142 = vmatprep.subr.mxu0 0.0
    %143 = vmatpush1.msra.mxu0 0.0
    %144 = vmatprep.subr.mxu0 0.0
    %145 = vmatpush1.msra.mxu0 0.0
    %146 = vmatprep.subr.mxu0 0.0
    %147 = vmatpush1.msra.mxu0 0.0
    %148 = vmatprep.subr.mxu0 0.0
    %149 = vmatpush1.msra.mxu0 0.0
    %150 = vmatprep.mubr.f32.mxu0 0.0
    %151 = vmatmul.mubr.f32.gmra.mrb[0].mxu0 %v84
    %v152 = vpop.f32.mrb[0].mxu0
    %v153 = vadd.f32 0.0, %v152
    %v154 = vpop.f32.mrb[0].mxu0
    %155 = vdwg.mxu0
    %v156 = vmax.f32 %v153, 0.0
    %v157 = vld [vmem:[%s2] sm:$0xf]
    %vm158 = vcmask 31744
    %v160 = vsel %vm158, %v156, 0
    %vm162 = vcmask 1043456
    %v164 = vsel %vm162, %v157, 0
    %166 = vmatprep.subr.mxu0 0.0
    %167 = vmatpush1.msra.mxu0 %v164
    %168 = vmatprep.subr.mxu0 0.0
    %169 = vmatpush1.msra.mxu0 0.0
    %170 = vmatprep.subr.mxu0 0.0
    %171 = vmatpush1.msra.mxu0 0.0
    %172 = vmatprep.subr.mxu0 0.0
    %173 = vmatpush1.msra.mxu0 0.0
    %174 = vmatprep.subr.mxu0 0.0
    %175 = vmatpush1.msra.mxu0 0.0
    %176 = vmatprep.subr.mxu0 0.0
    %177 = vmatpush1.msra.mxu0 0.0
    %178 = vmatprep.subr.mxu0 0.0
    %179 = vmatpush1.msra.mxu0 0.0
    %180 = vmatprep.subr.mxu0 0.0
    %181 = vmatpush1.msra.mxu0 0.0
    %182 = vmatprep.subr.mxu0 0.0
    %183 = vmatpush1.msra.mxu0 0.0
    %184 = vmatprep.subr.mxu0 0.0
    %185 = vmatpush1.msra.mxu0 0.0
    %186 = vmatprep.subr.mxu0 0.0
    %187 = vmatpush1.msra.mxu0 0.0
    %188 = vmatprep.subr.mxu0 0.0
    %189 = vmatpush1.msra.mxu0 0.0
    %190 = vmatprep.subr.mxu0 0.0
    %191 = vmatpush1.msra.mxu0 0.0
    %192 = vmatprep.subr.mxu0 0.0
    %193 = vmatpush1.msra.mxu0 0.0
    %194 = vmatprep.subr.mxu0 0.0
    %195 = vmatpush1.msra.mxu0 0.0
    %196 = vmatprep.subr.mxu0 0.0
    %197 = vmatpush1.msra.mxu0 0.0
    %198 = vmatprep.subr.mxu0 0.0
    %199 = vmatpush1.msra.mxu0 0.0
    %200 = vmatprep.subr.mxu0 0.0
    %201 = vmatpush1.msra.mxu0 0.0
    %202 = vmatprep.subr.mxu0 0.0
    %203 = vmatpush1.msra.mxu0 0.0
    %204 = vmatprep.subr.mxu0 0.0
    %205 = vmatpush1.msra.mxu0 0.0
    %206 = vmatprep.subr.mxu0 0.0
    %207 = vmatpush1.msra.mxu0 0.0
    %208 = vmatprep.subr.mxu0 0.0
    %209 = vmatpush1.msra.mxu0 0.0
    %210 = vmatprep.subr.mxu0 0.0
    %211 = vmatpush1.msra.mxu0 0.0
    %212 = vmatprep.subr.mxu0 0.0
    %213 = vmatpush1.msra.mxu0 0.0
    %214 = vmatprep.subr.mxu0 0.0
    %215 = vmatpush1.msra.mxu0 0.0
    %216 = vmatprep.subr.mxu0 0.0
    %217 = vmatpush1.msra.mxu0 0.0
    %218 = vmatprep.subr.mxu0 0.0
    %219 = vmatpush1.msra.mxu0 0.0
    %220 = vmatprep.subr.mxu0 0.0
    %221 = vmatpush1.msra.mxu0 0.0
    %222 = vmatprep.subr.mxu0 0.0
    %223 = vmatpush1.msra.mxu0 0.0
    %224 = vmatprep.subr.mxu0 0.0
    %225 = vmatpush1.msra.mxu0 0.0
    %226 = vmatprep.subr.mxu0 0.0
    %227 = vmatpush1.msra.mxu0 0.0
    %228 = vmatprep.subr.mxu0 0.0
    %229 = vmatpush1.msra.mxu0 0.0
    %230 = vmatprep.mubr.f32.mxu0 0.0
    %231 = vmatmul.mubr.f32.gmra.mrb[0].mxu0 %v160
    %v232 = vpop.f32.mrb[0].mxu0
    %v233 = vadd.f32 3.0, %v232
    %v234 = vpop.f32.mrb[0].mxu0
    %235 = vdwg.mxu0
    %v236 = vmax.f32 %v233, 0.0
    %v237 = vmin.f32 %v236, 6.0
    %v238 = vmul.f32 %v237, 0.16666667
    %v239 = vlaneseq
    %v240 = vshrl.u32 %v239, 7
    %v241 = vsub.s32 0, %v240
    %v242 = vrot.slane %v238, %v241
    %244 = vbcast.lane.b32.xlu0 %v242, 256
    %v245 = vpop.permute.xlu0 %244
    %s247 = sor.u32 256, 8
    %248 = vbcast.lane.b32.xlu0 %v242, %s247
    %v249 = vpop.permute.xlu0 %248
    %v250 = vlaneseq
    %v251 = vshrl.u32 %v250, 7
    %v252 = vsub.s32 1, %v251
    %v253 = vrot.slane %v238, %v252
    %255 = vbcast.lane.b32.xlu0 %v253, 256
    %v256 = vpop.permute.xlu0 %255
    %s258 = sor.u32 256, 8
    %259 = vbcast.lane.b32.xlu0 %v253, %s258
    %v260 = vpop.permute.xlu0 %259
    %v261 = vmul.f32 %v29, %v245
    %v262 = vmul.f32 %v30, %v245
    %v263 = vmul.f32 %v31, %v249
    %v264 = vmul.f32 %v32, %v249
    %v265 = vmul.f32 %v33, %v256
    %v266 = vmul.f32 %v34, %v256
    %v267 = vmul.f32 %v35, %v260
    %v268 = vmul.f32 %v36, %v260
    %269 = vst [vmem:[#allocation5] sm:$0xff] %v261
    %270 = vst [vmem:[#allocation5 + $0x8] sm:$0xff] %v262
    %271 = vst [vmem:[#allocation5 + $0x10] sm:$0xff] %v263
    %272 = vst [vmem:[#allocation5 + $0x18] sm:$0xff] %v264
    %273 = vst [vmem:[#allocation5 + $0x20] sm:$0xff] %v265
    %274 = vst [vmem:[#allocation5 + $0x28] sm:$0xff] %v266
    %275 = vst [vmem:[#allocation5 + $0x30] sm:$0xff] %v267
    %276 = vst [vmem:[#allocation5 + $0x38] sm:$0xff] %v268
    // Predicated region
    $region18: #{tpu_custom_call.1} parent=1 // pred_check
      _
    $region19: #{tpu_custom_call.1} parent=1 // pred_check_branch
      %278 = sbr.rel (0) target = $region21
    $region20: #{tpu_custom_call.1} parent=1 // pred_region
      %s280 = ssub.s32 1024, 1024
      %281 = vsyncadd [#allocation4], %s280
      %s282 = sshll.u32 [#allocation5], 4
      %s283 = int_to_ptr.vmem [resolvable:$true] %s282
      %288 = dma.vmem_to_hbm [thread:$0]  %s283, 1024, %s3, [#allocation4], 256, 256, 16
    $region21: #{tpu_custom_call.1} parent=1 // pred_fallthru
      _
    // Predicated region
    $region22: #{tpu_custom_call.1} parent=1 // pred_check
      _
    $region23: #{tpu_custom_call.1} parent=1 // pred_check_branch
      %290 = sbr.rel (0) target = $region25
    $region24: #{tpu_custom_call.1} parent=1 // pred_region
      %291 = dma.done [#allocation4], 1024
    $region25: #{tpu_custom_call.1} parent=1 // pred_fallthru
      _
    %292 = vsyncpa [#allocation3], 1
    %293 = vsyncpa [#allocation4], 1

</llo_original>
